<compile_context>
chip_gen: v5e
topology: v5e:2x2
jax: 0.10.0
libtpu: 0.0.40
codegen_flags: <defaults>
</compile_context>

<pallas_src>
import functools

import jax
import jax.numpy as jnp
from jax.experimental import pallas as pl
from jax.experimental.pallas import tpu as pltpu


def _inform_kernel(l_ref, x_ref, out_ref, *, tm, tk):
    """Accumulates sum(L_tile * (x_i @ x_k^T)) into the per-row-tile output.

    grid = (N // TM, N // TK):
      axis 0 (i): row tiles of L (parallel-safe: disjoint output blocks)
      axis 1 (k): column tiles of L (reduction, resident output accumulator)
    """
    i = pl.program_id(0)
    k = pl.program_id(1)

    row_i = pl.multiple_of(i * tm, tm)
    row_k = pl.multiple_of(k * tk, tk)
    xi = x_ref[pl.ds(row_i, tm), :]          # [tm, d] f32, resident in VMEM
    xk = x_ref[pl.ds(row_k, tk), :]          # [tk, d] f32, resident in VMEM

    # Lane-dense Gram tile on the MXU: [tm, d] @ [d, tk] -> [tm, tk] (f32 acc).
    g = jnp.dot(xi, xk.T, preferred_element_type=jnp.float32)

    # Lane-dense elementwise product with the bf16 L tile + full reduce.
    tile_sum = jnp.sum(l_ref[...].astype(jnp.float32) * g)

    # First k-step writes directly (no zero-then-add); later steps accumulate
    # into the resident per-row-tile output block.
    @pl.when(k == 0)
    def _():
        out_ref[...] = jnp.full(out_ref.shape, tile_sum, dtype=out_ref.dtype)

    @pl.when(k > 0)
    def _():
        out_ref[...] = out_ref[...] + tile_sum


def inform_bias(laplacian: jax.Array, x: jax.Array, nnz: int,
                *, tm: int = 512, tk: int = 512,
                l_dtype=jnp.bfloat16) -> jax.Array:
    """bias = trace(x^T @ (L @ x)) / nnz with the hot path in Pallas.

    L is streamed from HBM in `l_dtype` (bf16 by default: it is the dominant
    byte stream of this HBM-bound kernel); x stays fully resident in VMEM in
    float32 with f32 MXU accumulation.
    """
    n, d = x.shape
    assert laplacian.shape == (n, n)

    tm = min(tm, n)
    tk = min(tk, n)
    assert n % tm == 0 and n % tk == 0, (n, tm, tk)
    grid_i, grid_k = n // tm, n // tk

    # Cast once only if needed (no-op when caller already stores L in l_dtype;
    # avoids an extra full-HBM rewrite pass before the kernel).
    if laplacian.dtype != l_dtype:
        laplacian = laplacian.astype(l_dtype)
    if x.dtype != jnp.float32:
        x = x.astype(jnp.float32)

    # VMEM budget: double-buffered L tiles + resident x + tiny output block.
    l_bytes = jnp.dtype(l_dtype).itemsize
    est = 2 * tm * tk * l_bytes + 2 * n * d * 4 + 2 * 8 * 128 * 4
    vmem_limit = int(min(max(2 * est, 16 * 1024 * 1024), 48 * 1024 * 1024))

    kernel = functools.partial(_inform_kernel, tm=tm, tk=tk)

    partials = pl.pallas_call(
        kernel,
        out_shape=jax.ShapeDtypeStruct((grid_i, 8, 128), jnp.float32),
        grid_spec=pltpu.PrefetchScalarGridSpec(
            num_scalar_prefetch=0,
            grid=(grid_i, grid_k),
            in_specs=[
                # L tile [tm, tk] at block (i, k): the single large HBM stream.
                # TODO(synk): if the L DMA is still exposed after the tile bump,
                #             try pipeline_mode=pl.Buffered(3) on this spec.
                pl.BlockSpec((tm, tk), lambda i, k: (i, k)),
                # x fully resident in VMEM (constant block index -> one DMA).
                pl.BlockSpec((n, d), lambda i, k: (0, 0)),
            ],
            # Per-row-tile partial sums, lane-dense (8,128) blocks indexed only
            # by i so grid axis 0 can be sharded across TensorCores (megacore).
            out_specs=pl.BlockSpec((1, 8, 128), lambda i, k: (i, 0, 0)),
        ),
        compiler_params=pltpu.CompilerParams(
            dimension_semantics=("parallel", "arbitrary"),
            vmem_limit_bytes=vmem_limit,
        ),
    )(laplacian, x)

    # Every element of an (8,128) block holds the same per-row-tile scalar.
    trace_sum = jnp.sum(partials[:, 0, 0])
    return trace_sum / jnp.float32(nnz)


def _build_synthetic_laplacian(key, n: int):
    """Deterministically build a sparse-ish symmetric graph Laplacian L = D - A."""
    s = jax.random.uniform(key, (n, n), dtype=jnp.float32)
    s = 0.5 * (s + s.T)
    adj = jnp.where(s > 0.9, s, 0.0)          # sparsify
    adj = adj - jnp.diag(jnp.diag(adj))       # no self loops
    deg = jnp.sum(adj, axis=1)
    lap = jnp.diag(deg) - adj
    nnz = int(jnp.sum(lap != 0.0))            # matches torch sparse .values().shape[0]
    return lap, nnz


if __name__ == "__main__":
    key = jax.random.PRNGKey(0)
    k_lap, k_x = jax.random.split(key)

    N, D = 512, 32  # small: 512 nodes, 32-dim node outputs
    laplacian, nnz = _build_synthetic_laplacian(k_lap, N)
    x = jax.random.normal(k_x, (N, D), dtype=jnp.float32)

    # tm=tk=256 so even this small demo exercises a (2, 2) grid
    # (parallel row axis + k-reduction accumulation path).
    bias = inform_bias(laplacian, x, nnz, tm=256, tk=256)
    bias = jax.block_until_ready(bias)

    # Reference (plain JAX), with L passed through the same bf16 streaming
    # dtype so the comparison isolates kernel correctness from the quant step.
    lap_stream = laplacian.astype(jnp.bfloat16).astype(jnp.float32)
    ref = jnp.trace(x.T @ (lap_stream @ x)) / nnz
    assert jnp.allclose(bias, ref, rtol=1e-2, atol=1e-2), (bias, ref)

    print("KERNEL_OK")
</pallas_src>

<mosaic_0001>
module attributes {stable_mosaic.version = 11 : i64} {
  func.func @_inform_kernel(%arg0: i32, %arg1: i32, %arg2: memref<256x256xbf16, #tpu.memory_space<vmem>>, %arg3: memref<512x32xf32, #tpu.memory_space<vmem>>, %arg4: memref<1x8x128xf32, #tpu.memory_space<vmem>>) attributes {dimension_semantics = [#tpu.dimension_semantics<parallel>, #tpu.dimension_semantics<arbitrary>], iteration_bounds = array<i64: 2, 2>, scalar_prefetch = 0 : i64, scratch_operands = 0 : i64, tpu.core_type = #tpu.core_type<tc>, window_params = [{transform_indices = @transform_0, window_bounds = array<i64: 256, 256>}, {pipeline_mode = #tpu.pipeline_mode<synchronous>, transform_indices = @transform_1, window_bounds = array<i64: 512, 32>}, {transform_indices = @transform_2, window_bounds = array<i64: 1, 8, 128>}]} {
    %c256_i32 = arith.constant 256 : i32
    %0 = arith.muli %arg0, %c256_i32 : i32
    %1 = tpu.assume_multiple %0, 256 : i32
    %c256_i32_0 = arith.constant 256 : i32
    %2 = arith.muli %arg1, %c256_i32_0 : i32
    %3 = tpu.assume_multiple %2, 256 : i32
    %4 = arith.index_cast %1 : i32 to index
    %c0 = arith.constant 0 : index
    %5 = vector.load %arg3[%4, %c0] : memref<512x32xf32, #tpu.memory_space<vmem>>, vector<256x32xf32>
    %6 = arith.index_cast %3 : i32 to index
    %c0_1 = arith.constant 0 : index
    %7 = vector.load %arg3[%6, %c0_1] : memref<512x32xf32, #tpu.memory_space<vmem>>, vector<256x32xf32>
    %8 = tpu.transpose %7, [1, 0] : vector<256x32xf32> -> vector<32x256xf32>
    %cst = arith.constant dense<0.000000e+00> : vector<256x256xf32>
    %9 = tpu.matmul %5, %8, %cst {dimension_numbers = #tpu.dot_dimension_numbers<[1], [0], [0], [1], [0, 0, 1, 1], [], []>} : vector<256x32xf32>, vector<32x256xf32>, vector<256x256xf32> -> vector<256x256xf32>
    %c0_2 = arith.constant 0 : index
    %c0_3 = arith.constant 0 : index
    %10 = vector.load %arg2[%c0_2, %c0_3] : memref<256x256xbf16, #tpu.memory_space<vmem>>, vector<256x256xbf16>
    %11 = arith.extf %10 : vector<256x256xbf16> to vector<256x256xf32>
    %12 = arith.mulf %11, %9 : vector<256x256xf32>
    %13 = vector.shape_cast %12 : vector<256x256xf32> to vector<1x256x256xf32>
    %cst_4 = arith.constant dense<0.000000e+00> : vector<1xf32>
    %14 = vector.multi_reduction <add>, %13, %cst_4 [1, 2] : vector<1x256x256xf32> to vector<1xf32>
    %15 = vector.shape_cast %14 : vector<1xf32> to vector<1x1x1xf32>
    %16 = vector.extract %15[0, 0, 0] : f32 from vector<1x1x1xf32>
    %c0_i32 = arith.constant 0 : i32
    %17 = arith.cmpi eq, %arg1, %c0_i32 : i32
    %18 = arith.extui %17 : i1 to i32
    %c0_i32_5 = arith.constant 0 : i32
    %19 = arith.cmpi ne, %18, %c0_i32_5 : i32
    scf.if %19 {
      %23 = vector.broadcast %16 : f32 to vector<1x8x128xf32>
      %c0_8 = arith.constant 0 : index
      %c0_9 = arith.constant 0 : index
      %c0_10 = arith.constant 0 : index
      %24 = vector.load %arg4[%c0_8, %c0_9, %c0_10] : memref<1x8x128xf32, #tpu.memory_space<vmem>>, vector<1x8x128xf32>
      tpu.vector_store %arg4[%c0_8, %c0_9, %c0_10], %23 {strides = array<i32>} : memref<1x8x128xf32, #tpu.memory_space<vmem>>, vector<1x8x128xf32>,
    } else {
    }
    %c0_i32_6 = arith.constant 0 : i32
    %20 = arith.cmpi sgt, %arg1, %c0_i32_6 : i32
    %21 = arith.extui %20 : i1 to i32
    %c0_i32_7 = arith.constant 0 : i32
    %22 = arith.cmpi ne, %21, %c0_i32_7 : i32
    scf.if %22 {
      %c0_8 = arith.constant 0 : index
      %c0_9 = arith.constant 0 : index
      %c0_10 = arith.constant 0 : index
      %23 = vector.load %arg4[%c0_8, %c0_9, %c0_10] : memref<1x8x128xf32, #tpu.memory_space<vmem>>, vector<1x8x128xf32>
      %24 = vector.broadcast %16 : f32 to vector<1x8x128xf32>
      %25 = arith.addf %23, %24 : vector<1x8x128xf32>
      %c0_11 = arith.constant 0 : index
      %c0_12 = arith.constant 0 : index
      %c0_13 = arith.constant 0 : index
      %26 = vector.load %arg4[%c0_11, %c0_12, %c0_13] : memref<1x8x128xf32, #tpu.memory_space<vmem>>, vector<1x8x128xf32>
      tpu.vector_store %arg4[%c0_11, %c0_12, %c0_13], %25 {strides = array<i32>} : memref<1x8x128xf32, #tpu.memory_space<vmem>>, vector<1x8x128xf32>,
    } else {
    }
    return
  }
  func.func @transform_0(%arg0: i32, %arg1: i32) -> (i32, i32) {
    %c0_i32 = arith.constant 0 : i32
    return %arg0, %arg1 : i32, i32
  }
  func.func @transform_1(%arg0: i32, %arg1: i32) -> (i32, i32) {
    %c0_i32 = arith.constant 0 : i32
    %c0_i32_0 = arith.constant 0 : i32
    %c0_i32_1 = arith.constant 0 : i32
    return %c0_i32, %c0_i32_0 : i32, i32
  }
  func.func @transform_2(%arg0: i32, %arg1: i32) -> (i32, i32, i32) {
    %c0_i32 = arith.constant 0 : i32
    %c0_i32_0 = arith.constant 0 : i32
    %c0_i32_1 = arith.constant 0 : i32
    return %arg0, %c0_i32, %c0_i32_0 : i32, i32, i32
  }
}

</mosaic_0001>

<llo_original>
// kernel: tpu_custom_call.1
$region0: #{tpu_custom_call.1}
  #allocation0 [shape = 'u32[]', space=smem, size = 0x4, offset = 0x4, fixed_abs, tag = 'smem constant byte address 0x4 - core index']
  #allocation1 [shape = 'u32[72,128]{1,0:T(1,128)}', space=vmem, size = 0x9000, scoped, tag = 'internal scratch']
  %s0 = inlined_call_operand.hbm [shape: bf16[512,512], index: 0, kind: input, shape index: {}]
  %s1 = inlined_call_operand.vmem [shape: f32[512,32], index: 1, kind: input, shape index: {}]
  %s2 = inlined_call_operand.hbm [shape: f32[2,8,128], index: 2, kind: output, shape index: {}]
  %s3 = sld [smem:[#allocation0]]
  $region53: #{tpu_custom_call.1} parent=0
    _
  %s5 = ssub.s32 1, %s3
  %s6 = scalar_select 0, %s5, %s3
  $region1: #{tpu_custom_call.1} parent=0
    #allocation2 [shape = 'u8[262144]{0}', space=vmem, size = 0x40000, scoped, tag = 'input window, operand 0']
    #allocation3 [shape = 's32[2]{0}', space=sflag, size = 0x8, scoped, tag = 'scoped memory for tpu_custom_call.1']
    #allocation4 [shape = 's32[2]{0}', space=sflag, size = 0x8, scoped, tag = 'scoped memory for tpu_custom_call.1']
    #allocation5 [shape = 'u8[8192]{0}', space=vmem, size = 0x2000, scoped, tag = 'output window, operand 0']
    %7 = vsyncpa [#allocation3], 0
    %s8 = scalar_lea.sflag [#allocation3], 1
    %9 = vsyncpa %s8, 0
    %10 = vsyncpa [#allocation4], 0
    %s11 = scalar_lea.sflag [#allocation4], 1
    %12 = vsyncpa %s11, 0
    loop: start=0, step=1, limit=6
    $region2: #{tpu_custom_call.1} parent=1 // loop_pre_header
      _
    $region3: #{tpu_custom_call.1} parent=1 // loop_header
      %s14 = sphi 0, %s18
      %p15 = scmp.ge.s32.totalorder %s14, 6
      %s21 = sphi 0, %s33
      %s22 = sphi 0, %s29
      %s23 = sphi 0, %s21
      %s24 = sphi 0, %s22
      %s25 = sphi 0, %s23
      %s26 = sphi 0, %s24
      %s38 = sphi 0, %s40
      %s41 = sphi 0, %s38
      %s42 = sphi 0, %s41
      %s58 = sphi 0, %s42
      %s62 = sphi 0, %s62
      %s64 = sphi 0, %s62
      %s65 = sphi 0, %s64
      %s79 = sphi 0, %s65
      %s85 = sphi 0, %s87
      %s88 = sphi 0, %s85
      %s89 = sphi 0, %s88
      %s105 = sphi 0, %s89
    $region4: #{tpu_custom_call.1} parent=1 // loop_header_branch
      %17 = sbr.rel (%p15) target = $region8
    $region5: #{tpu_custom_call.1} parent=1 // loop_body
      %s19 = ssub.s32 %s14, 1
      %s20 = ssub.s32 %s14, 2
      %s27 = sadd.s32 1, %s22
      %p28 = scmp.ge.s32.totalorder %s27, 2
      %s29 = scalar_select %p28, 0, %s27
      %s30 = sadd.s32 1, %s21
      %s31 = scalar_select %p28, %s30, %s21
      %p32 = scmp.ge.s32.totalorder %s31, 2
      %s33 = scalar_select %p32, 0, %s31
      %s34 = ssub.s32 %s21, %s33
      %s35 = ssub.s32 %s22, %s29
      %s36 = sor.u32 %s34, %s35
      %p37 = scmp.eq.s32.totalorder %s36, 0
      %s39 = sadd.s32 %s38, 1
      %s40 = scalar_select %p37, %s38, %s39
      %p43 = pneg %p37
      %p44 = scmp.eq.s32.totalorder %s14, 3
      %p45 = por %p43, %p44
      %p46 = scmp.ne.s32.totalorder %s38, %s41
      %p47 = scmp.eq.s32.totalorder %s14, 0
      %p48 = por %p46, %p47
      %p49 = scmp.ne.s32.totalorder %s38, %s41
      %p50 = scmp.eq.s32.totalorder %s19, 3
      %p51 = por %p49, %p50
      %p52 = scmp.ne.s32.totalorder %s41, %s42
      %p53 = scmp.eq.s32.totalorder %s19, 0
      %p54 = por %p52, %p53
      %p55 = scmp.ne.s32.totalorder %s41, %s42
      %p56 = scmp.eq.s32.totalorder %s20, 3
      %p57 = por %p55, %p56
      %p59 = scmp.ne.s32.totalorder %s42, %s58
      %p60 = scmp.eq.s32.totalorder %s20, 0
      %p61 = por %p59, %p60
      %s63 = sadd.s32 %s62, 1
      %p66 = scmp.eq.s32.totalorder %s14, 3
      %p67 = scmp.ne.s32.totalorder %s62, %s64
      %p68 = scmp.eq.s32.totalorder %s14, 0
      %p69 = por %p67, %p68
      %p70 = scmp.ne.s32.totalorder %s62, %s64
      %p71 = scmp.eq.s32.totalorder %s19, 3
      %p72 = por %p70, %p71
      %p73 = scmp.ne.s32.totalorder %s64, %s65
      %p74 = scmp.eq.s32.totalorder %s19, 0
      %p75 = por %p73, %p74
      %p76 = scmp.ne.s32.totalorder %s64, %s65
      %p77 = scmp.eq.s32.totalorder %s20, 3
      %p78 = por %p76, %p77
      %p80 = scmp.ne.s32.totalorder %s65, %s79
      %p81 = scmp.eq.s32.totalorder %s20, 0
      %p82 = por %p80, %p81
      %s83 = ssub.s32 %s21, %s33
      %p84 = scmp.eq.s32.totalorder %s83, 0
      %s86 = sadd.s32 %s85, 1
      %s87 = scalar_select %p84, %s85, %s86
      %p90 = pneg %p84
      %p91 = scmp.eq.s32.totalorder %s14, 3
      %p92 = por %p90, %p91
      %p93 = scmp.ne.s32.totalorder %s85, %s88
      %p94 = scmp.eq.s32.totalorder %s14, 0
      %p95 = por %p93, %p94
      %p96 = scmp.ne.s32.totalorder %s85, %s88
      %p97 = scmp.eq.s32.totalorder %s19, 3
      %p98 = por %p96, %p97
      %p99 = scmp.ne.s32.totalorder %s88, %s89
      %p100 = scmp.eq.s32.totalorder %s19, 0
      %p101 = por %p99, %p100
      %p102 = scmp.ne.s32.totalorder %s88, %s89
      %p103 = scmp.eq.s32.totalorder %s20, 3
      %p104 = por %p102, %p103
      %p106 = scmp.ne.s32.totalorder %s89, %s105
      %p107 = scmp.eq.s32.totalorder %s20, 0
      %p108 = por %p106, %p107
      %p109 = scmp.le.s32.totalorder 1, %s14
      %p110 = scmp.lt.s32.totalorder %s14, 5
      %p111 = pnand %p109, %p110
      %p112 = pneg %p111
      // Predicated region
      $region9: #{tpu_custom_call.1} parent=5 // pred_check
        _
      $region10: #{tpu_custom_call.1} parent=5 // pred_check_branch
        %114 = sbr.rel (%p111) target = $region12
      $region11: #{tpu_custom_call.1} parent=5 // pred_region
        %s115 = ssub.s32 %s14, 1
        // Predicated region
        $region13: #{tpu_custom_call.1} parent=11 // pred_check
          %p116 = pneg %p75
        $region14: #{tpu_custom_call.1} parent=11 // pred_check_branch
          %118 = sbr.rel (%p116) target = $region16
        $region15: #{tpu_custom_call.1} parent=11 // pred_region
          _
        $region16: #{tpu_custom_call.1} parent=11 // pred_fallthru
          _
      $region12: #{tpu_custom_call.1} parent=5 // pred_fallthru
        _
      %p119 = scmp.lt.s32.totalorder %s14, 4
      // Predicated region
      $region17: #{tpu_custom_call.1} parent=5 // pred_check
        %p120 = pneg %p119
      $region18: #{tpu_custom_call.1} parent=5 // pred_check_branch
        %122 = sbr.rel (%p120) target = $region20
      $region19: #{tpu_custom_call.1} parent=5 // pred_region
        // Predicated region
        $region21: #{tpu_custom_call.1} parent=19 // pred_check
          %p123 = pneg %p48
        $region22: #{tpu_custom_call.1} parent=19 // pred_check_branch
          %125 = sbr.rel (%p123) target = $region24
        $region23: #{tpu_custom_call.1} parent=19 // pred_region
          %s126 = sand.u32 %s38, 1
          %s127 = scalar_lea.sflag [#allocation3], %s126
          %s128 = sand.u32 %s38, 1
          %s129 = smul.addr %s128, 256
          %s130 = scalar_lea.vmem [#allocation2], %s129
          %s131 = smul.u32 32, %s21
          %s132 = smul.u32 2, %s22
          %134 = vsyncadd %s127, 0
          %s135 = smul.addr %s131, 4
          %s136 = sadd.s32 %s132, %s135
          %s137 = smul.addr %s136, 4
          %s138 = scalar_lea.hbm %s0, %s137
          %s139 = sshll.u32 %s138, 4
          %s140 = int_to_ptr.hbm [resolvable:$true] %s139
          %s141 = sshll.u32 %s130, 4
          %s142 = int_to_ptr.vmem [resolvable:$true] %s141
          %147 = dma.hbm_to_vmem [thread:$0]  %s140, 4096, %s142, %s127, 256, 128, 8
        $region24: #{tpu_custom_call.1} parent=19 // pred_fallthru
          _
      $region20: #{tpu_custom_call.1} parent=5 // pred_fallthru
        _
      %p148 = scmp.le.s32.totalorder 1, %s14
      %p149 = scmp.lt.s32.totalorder %s14, 5
      %p150 = pnand %p148, %p149
      %p151 = pneg %p150
      // Predicated region
      $region25: #{tpu_custom_call.1} parent=5 // pred_check
        _
      $region26: #{tpu_custom_call.1} parent=5 // pred_check_branch
        %153 = sbr.rel (%p150) target = $region28
      $region27: #{tpu_custom_call.1} parent=5 // pred_region
        %s154 = ssub.s32 %s14, 1
        %s155 = sand.u32 %s41, 1
        %s156 = scalar_lea.sflag [#allocation3], %s155
        %s157 = sand.u32 %s41, 1
        %s158 = smul.addr %s157, 256
        %s159 = scalar_lea.vmem [#allocation2], %s158
        // Predicated region
        $region29: #{tpu_custom_call.1} parent=27 // pred_check
          %p160 = pneg %p54
        $region30: #{tpu_custom_call.1} parent=27 // pred_check_branch
          %162 = sbr.rel (%p160) target = $region32
        $region31: #{tpu_custom_call.1} parent=27 // pred_region
          %164 = dma.done %s156, 4096
        $region32: #{tpu_custom_call.1} parent=27 // pred_fallthru
          _
        %s165 = sand.u32 %s41, 1
        %s166 = scalar_lea.sflag [#allocation3], %s165
        %s167 = sand.u32 %s41, 1
        %s168 = smul.addr %s167, 256
        %s169 = scalar_lea.vmem [#allocation2], %s168
        %p170 = pneg %p54
        %p171 = pneg %p51
        %p172 = pneg %p75
        %p173 = pneg %p72
        %p174 = pneg %p101
        %p175 = pneg %p98
        %s176 = sand.u32 %s88, 1
        %s177 = scalar_lea.sflag [#allocation4], %s176
        %s178 = sand.u32 %s88, 1
        %s179 = smul.addr %s178, 8
        %s180 = scalar_lea.vmem [#allocation5], %s179
        %s181 = smul.u32 32, %s23
        %s182 = smul.u32 2, %s24
        %s183 = smul.u32 %s23, 256
        %s184 = smul.u32 %s24, 256
        %s185 = scalar_lea.vmem %s1, %s183
        %v186 = vld [vmem:[%s185] sm:$0xff]
        %v187 = vld [vmem:[%s185 + $0x8] sm:$0xff]
        %v188 = vld [vmem:[%s185 + $0x10] sm:$0xff]
        %v189 = vld [vmem:[%s185 + $0x18] sm:$0xff]
        %v190 = vld [vmem:[%s185 + $0x20] sm:$0xff]
        %v191 = vld [vmem:[%s185 + $0x28] sm:$0xff]
        %v192 = vld [vmem:[%s185 + $0x30] sm:$0xff]
        %v193 = vld [vmem:[%s185 + $0x38] sm:$0xff]
        %v194 = vld [vmem:[%s185 + $0x40] sm:$0xff]
        %v195 = vld [vmem:[%s185 + $0x48] sm:$0xff]
        %v196 = vld [vmem:[%s185 + $0x50] sm:$0xff]
        %v197 = vld [vmem:[%s185 + $0x58] sm:$0xff]
        %v198 = vld [vmem:[%s185 + $0x60] sm:$0xff]
        %v199 = vld [vmem:[%s185 + $0x68] sm:$0xff]
        %v200 = vld [vmem:[%s185 + $0x70] sm:$0xff]
        %v201 = vld [vmem:[%s185 + $0x78] sm:$0xff]
        %v202 = vld [vmem:[%s185 + $0x80] sm:$0xff]
        %v203 = vld [vmem:[%s185 + $0x88] sm:$0xff]
        %v204 = vld [vmem:[%s185 + $0x90] sm:$0xff]
        %v205 = vld [vmem:[%s185 + $0x98] sm:$0xff]
        %v206 = vld [vmem:[%s185 + $0xa0] sm:$0xff]
        %v207 = vld [vmem:[%s185 + $0xa8] sm:$0xff]
        %v208 = vld [vmem:[%s185 + $0xb0] sm:$0xff]
        %v209 = vld [vmem:[%s185 + $0xb8] sm:$0xff]
        %v210 = vld [vmem:[%s185 + $0xc0] sm:$0xff]
        %v211 = vld [vmem:[%s185 + $0xc8] sm:$0xff]
        %v212 = vld [vmem:[%s185 + $0xd0] sm:$0xff]
        %v213 = vld [vmem:[%s185 + $0xd8] sm:$0xff]
        %v214 = vld [vmem:[%s185 + $0xe0] sm:$0xff]
        %v215 = vld [vmem:[%s185 + $0xe8] sm:$0xff]
        %v216 = vld [vmem:[%s185 + $0xf0] sm:$0xff]
        %v217 = vld [vmem:[%s185 + $0xf8] sm:$0xff]
        %s218 = scalar_lea.vmem %s1, %s184
        %v219 = vld [vmem:[%s218] sm:$0xff]
        %v220 = vld [vmem:[%s218 + $0x8] sm:$0xff]
        %v221 = vld [vmem:[%s218 + $0x10] sm:$0xff]
        %v222 = vld [vmem:[%s218 + $0x18] sm:$0xff]
        %v223 = vld [vmem:[%s218 + $0x20] sm:$0xff]
        %v224 = vld [vmem:[%s218 + $0x28] sm:$0xff]
        %v225 = vld [vmem:[%s218 + $0x30] sm:$0xff]
        %v226 = vld [vmem:[%s218 + $0x38] sm:$0xff]
        %v227 = vld [vmem:[%s218 + $0x40] sm:$0xff]
        %v228 = vld [vmem:[%s218 + $0x48] sm:$0xff]
        %v229 = vld [vmem:[%s218 + $0x50] sm:$0xff]
        %v230 = vld [vmem:[%s218 + $0x58] sm:$0xff]
        %v231 = vld [vmem:[%s218 + $0x60] sm:$0xff]
        %v232 = vld [vmem:[%s218 + $0x68] sm:$0xff]
        %v233 = vld [vmem:[%s218 + $0x70] sm:$0xff]
        %v234 = vld [vmem:[%s218 + $0x78] sm:$0xff]
        %v235 = vld [vmem:[%s218 + $0x80] sm:$0xff]
        %v236 = vld [vmem:[%s218 + $0x88] sm:$0xff]
        %v237 = vld [vmem:[%s218 + $0x90] sm:$0xff]
        %v238 = vld [vmem:[%s218 + $0x98] sm:$0xff]
        %v239 = vld [vmem:[%s218 + $0xa0] sm:$0xff]
        %v240 = vld [vmem:[%s218 + $0xa8] sm:$0xff]
        %v241 = vld [vmem:[%s218 + $0xb0] sm:$0xff]
        %v242 = vld [vmem:[%s218 + $0xb8] sm:$0xff]
        %v243 = vld [vmem:[%s218 + $0xc0] sm:$0xff]
        %v244 = vld [vmem:[%s218 + $0xc8] sm:$0xff]
        %v245 = vld [vmem:[%s218 + $0xd0] sm:$0xff]
        %v246 = vld [vmem:[%s218 + $0xd8] sm:$0xff]
        %v247 = vld [vmem:[%s218 + $0xe0] sm:$0xff]
        %v248 = vld [vmem:[%s218 + $0xe8] sm:$0xff]
        %v249 = vld [vmem:[%s218 + $0xf0] sm:$0xff]
        %v250 = vld [vmem:[%s218 + $0xf8] sm:$0xff]
        %vm251 = vcmask 261120
        %v253 = vsel %vm251, %v186, 0
        %v256 = vsel %vm251, %v187, 0
        %v259 = vsel %vm251, %v188, 0
        %v262 = vsel %vm251, %v189, 0
        %v265 = vsel %vm251, %v190, 0
        %v268 = vsel %vm251, %v191, 0
        %v271 = vsel %vm251, %v192, 0
        %v274 = vsel %vm251, %v193, 0
        %v277 = vsel %vm251, %v194, 0
        %v280 = vsel %vm251, %v195, 0
        %v283 = vsel %vm251, %v196, 0
        %v286 = vsel %vm251, %v197, 0
        %v289 = vsel %vm251, %v198, 0
        %v292 = vsel %vm251, %v199, 0
        %v295 = vsel %vm251, %v200, 0
        %v298 = vsel %vm251, %v201, 0
        %v301 = vsel %vm251, %v202, 0
        %v304 = vsel %vm251, %v203, 0
        %v307 = vsel %vm251, %v204, 0
        %v310 = vsel %vm251, %v205, 0
        %v313 = vsel %vm251, %v206, 0
        %v316 = vsel %vm251, %v207, 0
        %v319 = vsel %vm251, %v208, 0
        %v322 = vsel %vm251, %v209, 0
        %v325 = vsel %vm251, %v210, 0
        %v328 = vsel %vm251, %v211, 0
        %v331 = vsel %vm251, %v212, 0
        %v334 = vsel %vm251, %v213, 0
        %v337 = vsel %vm251, %v214, 0
        %v340 = vsel %vm251, %v215, 0
        %v343 = vsel %vm251, %v216, 0
        %v346 = vsel %vm251, %v217, 0
        %v349 = vsel %vm251, %v219, 0
        %v352 = vsel %vm251, %v220, 0
        %v355 = vsel %vm251, %v221, 0
        %v358 = vsel %vm251, %v222, 0
        %v361 = vsel %vm251, %v223, 0
        %v364 = vsel %vm251, %v224, 0
        %v367 = vsel %vm251, %v225, 0
        %v370 = vsel %vm251, %v226, 0
        %v373 = vsel %vm251, %v227, 0
        %v376 = vsel %vm251, %v228, 0
        %v379 = vsel %vm251, %v229, 0
        %v382 = vsel %vm251, %v230, 0
        %v385 = vsel %vm251, %v231, 0
        %v388 = vsel %vm251, %v232, 0
        %v391 = vsel %vm251, %v233, 0
        %v394 = vsel %vm251, %v234, 0
        %v397 = vsel %vm251, %v235, 0
        %v400 = vsel %vm251, %v236, 0
        %v403 = vsel %vm251, %v237, 0
        %v406 = vsel %vm251, %v238, 0
        %v409 = vsel %vm251, %v239, 0
        %v412 = vsel %vm251, %v240, 0
        %v415 = vsel %vm251, %v241, 0
        %v418 = vsel %vm251, %v242, 0
        %v421 = vsel %vm251, %v243, 0
        %v424 = vsel %vm251, %v244, 0
        %v427 = vsel %vm251, %v245, 0
        %v430 = vsel %vm251, %v246, 0
        %v433 = vsel %vm251, %v247, 0
        %v436 = vsel %vm251, %v248, 0
        %v439 = vsel %vm251, %v249, 0
        %v442 = vsel %vm251, %v250, 0
        %444 = vmatpush.xpose.msra.mxu0 %v394
        %445 = vmatpush.xpose.msra.mxu0 %v391
        %446 = vmatpush.xpose.msra.mxu0 %v388
        %447 = vmatpush.xpose.msra.mxu0 %v385
        %448 = vmatpush.xpose.msra.mxu0 %v382
        %449 = vmatpush.xpose.msra.mxu0 %v379
        %450 = vmatpush.xpose.msra.mxu0 %v376
        %451 = vmatpush.xpose.msra.mxu0 %v373
        %452 = vmatpush.xpose.msra.mxu0 %v370
        %453 = vmatpush.xpose.msra.mxu0 %v367
        %454 = vmatpush.xpose.msra.mxu0 %v364
        %455 = vmatpush.xpose.msra.mxu0 %v361
        %456 = vmatpush.xpose.msra.mxu0 %v358
        %457 = vmatpush.xpose.msra.mxu0 %v355
        %458 = vmatpush.xpose.msra.mxu0 %v352
        %459 = vmatpush.xpose.msra.mxu0 %v349
        %460 = vmatmul.f32.gmra.mxu0 %v253
        %v461 = vpop.f32.mrf.mxu0
        %v462 = vadd.f32 0.0, %v461
        %463 = vmatmul.f32.gmra.mxu0 %v256
        %v464 = vpop.f32.mrf.mxu0
        %v465 = vadd.f32 0.0, %v464
        %466 = vmatmul.f32.gmra.mxu0 %v259
        %v467 = vpop.f32.mrf.mxu0
        %v468 = vadd.f32 0.0, %v467
        %469 = vmatmul.f32.gmra.mxu0 %v262
        %v470 = vpop.f32.mrf.mxu0
        %v471 = vadd.f32 0.0, %v470
        %472 = vmatmul.f32.gmra.mxu0 %v265
        %v473 = vpop.f32.mrf.mxu0
        %v474 = vadd.f32 0.0, %v473
        %475 = vmatmul.f32.gmra.mxu0 %v268
        %v476 = vpop.f32.mrf.mxu0
        %v477 = vadd.f32 0.0, %v476
        %478 = vmatmul.f32.gmra.mxu0 %v271
        %v479 = vpop.f32.mrf.mxu0
        %v480 = vadd.f32 0.0, %v479
        %481 = vmatmul.f32.gmra.mxu0 %v274
        %v482 = vpop.f32.mrf.mxu0
        %v483 = vadd.f32 0.0, %v482
        %484 = vmatmul.f32.gmra.mxu0 %v277
        %v485 = vpop.f32.mrf.mxu0
        %v486 = vadd.f32 0.0, %v485
        %487 = vmatmul.f32.gmra.mxu0 %v280
        %v488 = vpop.f32.mrf.mxu0
        %v489 = vadd.f32 0.0, %v488
        %490 = vmatmul.f32.gmra.mxu0 %v283
        %v491 = vpop.f32.mrf.mxu0
        %v492 = vadd.f32 0.0, %v491
        %493 = vmatmul.f32.gmra.mxu0 %v286
        %v494 = vpop.f32.mrf.mxu0
        %v495 = vadd.f32 0.0, %v494
        %496 = vmatmul.f32.gmra.mxu0 %v289
        %v497 = vpop.f32.mrf.mxu0
        %v498 = vadd.f32 0.0, %v497
        %499 = vmatmul.f32.gmra.mxu0 %v292
        %v500 = vpop.f32.mrf.mxu0
        %v501 = vadd.f32 0.0, %v500
        %502 = vmatmul.f32.gmra.mxu0 %v295
        %v503 = vpop.f32.mrf.mxu0
        %v504 = vadd.f32 0.0, %v503
        %505 = vmatmul.f32.gmra.mxu0 %v298
        %v506 = vpop.f32.mrf.mxu0
        %v507 = vadd.f32 0.0, %v506
        %508 = vmatmul.f32.gmra.mxu0 %v301
        %v509 = vpop.f32.mrf.mxu0
        %v510 = vadd.f32 0.0, %v509
        %511 = vmatmul.f32.gmra.mxu0 %v304
        %v512 = vpop.f32.mrf.mxu0
        %v513 = vadd.f32 0.0, %v512
        %514 = vmatmul.f32.gmra.mxu0 %v307
        %v515 = vpop.f32.mrf.mxu0
        %v516 = vadd.f32 0.0, %v515
        %517 = vmatmul.f32.gmra.mxu0 %v310
        %v518 = vpop.f32.mrf.mxu0
        %v519 = vadd.f32 0.0, %v518
        %520 = vmatmul.f32.gmra.mxu0 %v313
        %v521 = vpop.f32.mrf.mxu0
        %v522 = vadd.f32 0.0, %v521
        %523 = vmatmul.f32.gmra.mxu0 %v316
        %v524 = vpop.f32.mrf.mxu0
        %v525 = vadd.f32 0.0, %v524
        %526 = vmatmul.f32.gmra.mxu0 %v319
        %v527 = vpop.f32.mrf.mxu0
        %v528 = vadd.f32 0.0, %v527
        %529 = vmatmul.f32.gmra.mxu0 %v322
        %v530 = vpop.f32.mrf.mxu0
        %v531 = vadd.f32 0.0, %v530
        %532 = vmatmul.f32.gmra.mxu0 %v325
        %v533 = vpop.f32.mrf.mxu0
        %v534 = vadd.f32 0.0, %v533
        %535 = vmatmul.f32.gmra.mxu0 %v328
        %v536 = vpop.f32.mrf.mxu0
        %v537 = vadd.f32 0.0, %v536
        %538 = vmatmul.f32.gmra.mxu0 %v331
        %v539 = vpop.f32.mrf.mxu0
        %v540 = vadd.f32 0.0, %v539
        %541 = vmatmul.f32.gmra.mxu0 %v334
        %v542 = vpop.f32.mrf.mxu0
        %v543 = vadd.f32 0.0, %v542
        %544 = vmatmul.f32.gmra.mxu0 %v337
        %v545 = vpop.f32.mrf.mxu0
        %v546 = vadd.f32 0.0, %v545
        %547 = vmatmul.f32.gmra.mxu0 %v340
        %v548 = vpop.f32.mrf.mxu0
        %v549 = vadd.f32 0.0, %v548
        %550 = vmatmul.f32.gmra.mxu0 %v343
        %v551 = vpop.f32.mrf.mxu0
        %v552 = vadd.f32 0.0, %v551
        %553 = vmatmul.f32.gmra.mxu0 %v346
        %v554 = vpop.f32.mrf.mxu0
        %v555 = vadd.f32 0.0, %v554
        %556 = vdwg.mxu0
        %557 = vmatpush.xpose.msra.mxu0 %v442
        %558 = vmatpush.xpose.msra.mxu0 %v439
        %559 = vmatpush.xpose.msra.mxu0 %v436
        %560 = vmatpush.xpose.msra.mxu0 %v433
        %561 = vmatpush.xpose.msra.mxu0 %v430
        %562 = vmatpush.xpose.msra.mxu0 %v427
        %563 = vmatpush.xpose.msra.mxu0 %v424
        %564 = vmatpush.xpose.msra.mxu0 %v421
        %565 = vmatpush.xpose.msra.mxu0 %v418
        %566 = vmatpush.xpose.msra.mxu0 %v415
        %567 = vmatpush.xpose.msra.mxu0 %v412
        %568 = vmatpush.xpose.msra.mxu0 %v409
        %569 = vmatpush.xpose.msra.mxu0 %v406
        %570 = vmatpush.xpose.msra.mxu0 %v403
        %571 = vmatpush.xpose.msra.mxu0 %v400
        %572 = vmatpush.xpose.msra.mxu0 %v397
        %573 = vmatmul.f32.gmra.mxu0 %v253
        %v574 = vpop.f32.mrf.mxu0
        %v575 = vadd.f32 0.0, %v574
        %576 = vmatmul.f32.gmra.mxu0 %v256
        %v577 = vpop.f32.mrf.mxu0
        %v578 = vadd.f32 0.0, %v577
        %579 = vmatmul.f32.gmra.mxu0 %v259
        %v580 = vpop.f32.mrf.mxu0
        %v581 = vadd.f32 0.0, %v580
        %582 = vmatmul.f32.gmra.mxu0 %v262
        %v583 = vpop.f32.mrf.mxu0
        %v584 = vadd.f32 0.0, %v583
        %585 = vmatmul.f32.gmra.mxu0 %v265
        %v586 = vpop.f32.mrf.mxu0
        %v587 = vadd.f32 0.0, %v586
        %588 = vmatmul.f32.gmra.mxu0 %v268
        %v589 = vpop.f32.mrf.mxu0
        %v590 = vadd.f32 0.0, %v589
        %591 = vmatmul.f32.gmra.mxu0 %v271
        %v592 = vpop.f32.mrf.mxu0
        %v593 = vadd.f32 0.0, %v592
        %594 = vmatmul.f32.gmra.mxu0 %v274
        %v595 = vpop.f32.mrf.mxu0
        %v596 = vadd.f32 0.0, %v595
        %597 = vmatmul.f32.gmra.mxu0 %v277
        %v598 = vpop.f32.mrf.mxu0
        %v599 = vadd.f32 0.0, %v598
        %600 = vmatmul.f32.gmra.mxu0 %v280
        %v601 = vpop.f32.mrf.mxu0
        %v602 = vadd.f32 0.0, %v601
        %603 = vmatmul.f32.gmra.mxu0 %v283
        %v604 = vpop.f32.mrf.mxu0
        %v605 = vadd.f32 0.0, %v604
        %606 = vmatmul.f32.gmra.mxu0 %v286
        %v607 = vpop.f32.mrf.mxu0
        %v608 = vadd.f32 0.0, %v607
        %609 = vmatmul.f32.gmra.mxu0 %v289
        %v610 = vpop.f32.mrf.mxu0
        %v611 = vadd.f32 0.0, %v610
        %612 = vmatmul.f32.gmra.mxu0 %v292
        %v613 = vpop.f32.mrf.mxu0
        %v614 = vadd.f32 0.0, %v613
        %615 = vmatmul.f32.gmra.mxu0 %v295
        %v616 = vpop.f32.mrf.mxu0
        %v617 = vadd.f32 0.0, %v616
        %618 = vmatmul.f32.gmra.mxu0 %v298
        %v619 = vpop.f32.mrf.mxu0
        %v620 = vadd.f32 0.0, %v619
        %621 = vmatmul.f32.gmra.mxu0 %v301
        %v622 = vpop.f32.mrf.mxu0
        %v623 = vadd.f32 0.0, %v622
        %624 = vmatmul.f32.gmra.mxu0 %v304
        %v625 = vpop.f32.mrf.mxu0
        %v626 = vadd.f32 0.0, %v625
        %627 = vmatmul.f32.gmra.mxu0 %v307
        %v628 = vpop.f32.mrf.mxu0
        %v629 = vadd.f32 0.0, %v628
        %630 = vmatmul.f32.gmra.mxu0 %v310
        %v631 = vpop.f32.mrf.mxu0
        %v632 = vadd.f32 0.0, %v631
        %633 = vmatmul.f32.gmra.mxu0 %v313
        %v634 = vpop.f32.mrf.mxu0
        %v635 = vadd.f32 0.0, %v634
        %636 = vmatmul.f32.gmra.mxu0 %v316
        %v637 = vpop.f32.mrf.mxu0
        %v638 = vadd.f32 0.0, %v637
        %639 = vmatmul.f32.gmra.mxu0 %v319
        %v640 = vpop.f32.mrf.mxu0
        %v641 = vadd.f32 0.0, %v640
        %642 = vmatmul.f32.gmra.mxu0 %v322
        %v643 = vpop.f32.mrf.mxu0
        %v644 = vadd.f32 0.0, %v643
        %645 = vmatmul.f32.gmra.mxu0 %v325
        %v646 = vpop.f32.mrf.mxu0
        %v647 = vadd.f32 0.0, %v646
        %648 = vmatmul.f32.gmra.mxu0 %v328
        %v649 = vpop.f32.mrf.mxu0
        %v650 = vadd.f32 0.0, %v649
        %651 = vmatmul.f32.gmra.mxu0 %v331
        %v652 = vpop.f32.mrf.mxu0
        %v653 = vadd.f32 0.0, %v652
        %654 = vmatmul.f32.gmra.mxu0 %v334
        %v655 = vpop.f32.mrf.mxu0
        %v656 = vadd.f32 0.0, %v655
        %657 = vmatmul.f32.gmra.mxu0 %v337
        %v658 = vpop.f32.mrf.mxu0
        %v659 = vadd.f32 0.0, %v658
        %660 = vmatmul.f32.gmra.mxu0 %v340
        %v661 = vpop.f32.mrf.mxu0
        %v662 = vadd.f32 0.0, %v661
        %663 = vmatmul.f32.gmra.mxu0 %v343
        %v664 = vpop.f32.mrf.mxu0
        %v665 = vadd.f32 0.0, %v664
        %666 = vmatmul.f32.gmra.mxu0 %v346
        %v667 = vpop.f32.mrf.mxu0
        %v668 = vadd.f32 0.0, %v667
        %669 = vdwg.mxu0
        %v670 = vld [vmem:[%s159] sm:$0xff]
        %v671 = vld [vmem:[%s159 + $0x8] sm:$0xff]
        %v672 = vld [vmem:[%s159 + $0x10] sm:$0xff]
        %v673 = vld [vmem:[%s159 + $0x18] sm:$0xff]
        %v674 = vld [vmem:[%s159 + $0x20] sm:$0xff]
        %v675 = vld [vmem:[%s159 + $0x28] sm:$0xff]
        %v676 = vld [vmem:[%s159 + $0x30] sm:$0xff]
        %v677 = vld [vmem:[%s159 + $0x38] sm:$0xff]
        %v678 = vld [vmem:[%s159 + $0x40] sm:$0xff]
        %v679 = vld [vmem:[%s159 + $0x48] sm:$0xff]
        %v680 = vld [vmem:[%s159 + $0x50] sm:$0xff]
        %v681 = vld [vmem:[%s159 + $0x58] sm:$0xff]
        %v682 = vld [vmem:[%s159 + $0x60] sm:$0xff]
        %v683 = vld [vmem:[%s159 + $0x68] sm:$0xff]
        %v684 = vld [vmem:[%s159 + $0x70] sm:$0xff]
        %v685 = vld [vmem:[%s159 + $0x78] sm:$0xff]
        %v686 = vld [vmem:[%s159 + $0x80] sm:$0xff]
        %v687 = vld [vmem:[%s159 + $0x88] sm:$0xff]
        %v688 = vld [vmem:[%s159 + $0x90] sm:$0xff]
        %v689 = vld [vmem:[%s159 + $0x98] sm:$0xff]
        %v690 = vld [vmem:[%s159 + $0xa0] sm:$0xff]
        %v691 = vld [vmem:[%s159 + $0xa8] sm:$0xff]
        %v692 = vld [vmem:[%s159 + $0xb0] sm:$0xff]
        %v693 = vld [vmem:[%s159 + $0xb8] sm:$0xff]
        %v694 = vld [vmem:[%s159 + $0xc0] sm:$0xff]
        %v695 = vld [vmem:[%s159 + $0xc8] sm:$0xff]
        %v696 = vld [vmem:[%s159 + $0xd0] sm:$0xff]
        %v697 = vld [vmem:[%s159 + $0xd8] sm:$0xff]
        %v698 = vld [vmem:[%s159 + $0xe0] sm:$0xff]
        %v699 = vld [vmem:[%s159 + $0xe8] sm:$0xff]
        %v700 = vld [vmem:[%s159 + $0xf0] sm:$0xff]
        %v701 = vld [vmem:[%s159 + $0xf8] sm:$0xff]
        %v702 = vunpack.c.l.bf16 %v670
        %v703 = vunpack.c.h.bf16 %v670
        %v704 = vunpack.c.l.bf16 %v671
        %v705 = vunpack.c.h.bf16 %v671
        %v706 = vunpack.c.l.bf16 %v672
        %v707 = vunpack.c.h.bf16 %v672
        %v708 = vunpack.c.l.bf16 %v673
        %v709 = vunpack.c.h.bf16 %v673
        %v710 = vunpack.c.l.bf16 %v674
        %v711 = vunpack.c.h.bf16 %v674
        %v712 = vunpack.c.l.bf16 %v675
        %v713 = vunpack.c.h.bf16 %v675
        %v714 = vunpack.c.l.bf16 %v676
        %v715 = vunpack.c.h.bf16 %v676
        %v716 = vunpack.c.l.bf16 %v677
        %v717 = vunpack.c.h.bf16 %v677
        %v718 = vunpack.c.l.bf16 %v678
        %v719 = vunpack.c.h.bf16 %v678
        %v720 = vunpack.c.l.bf16 %v679
        %v721 = vunpack.c.h.bf16 %v679
        %v722 = vunpack.c.l.bf16 %v680
        %v723 = vunpack.c.h.bf16 %v680
        %v724 = vunpack.c.l.bf16 %v681
        %v725 = vunpack.c.h.bf16 %v681
        %v726 = vunpack.c.l.bf16 %v682
        %v727 = vunpack.c.h.bf16 %v682
        %v728 = vunpack.c.l.bf16 %v683
        %v729 = vunpack.c.h.bf16 %v683
        %v730 = vunpack.c.l.bf16 %v684
        %v731 = vunpack.c.h.bf16 %v684
        %v732 = vunpack.c.l.bf16 %v685
        %v733 = vunpack.c.h.bf16 %v685
        %v734 = vunpack.c.l.bf16 %v686
        %v735 = vunpack.c.h.bf16 %v686
        %v736 = vunpack.c.l.bf16 %v687
        %v737 = vunpack.c.h.bf16 %v687
        %v738 = vunpack.c.l.bf16 %v688
        %v739 = vunpack.c.h.bf16 %v688
        %v740 = vunpack.c.l.bf16 %v689
        %v741 = vunpack.c.h.bf16 %v689
        %v742 = vunpack.c.l.bf16 %v690
        %v743 = vunpack.c.h.bf16 %v690
        %v744 = vunpack.c.l.bf16 %v691
        %v745 = vunpack.c.h.bf16 %v691
        %v746 = vunpack.c.l.bf16 %v692
        %v747 = vunpack.c.h.bf16 %v692
        %v748 = vunpack.c.l.bf16 %v693
        %v749 = vunpack.c.h.bf16 %v693
        %v750 = vunpack.c.l.bf16 %v694
        %v751 = vunpack.c.h.bf16 %v694
        %v752 = vunpack.c.l.bf16 %v695
        %v753 = vunpack.c.h.bf16 %v695
        %v754 = vunpack.c.l.bf16 %v696
        %v755 = vunpack.c.h.bf16 %v696
        %v756 = vunpack.c.l.bf16 %v697
        %v757 = vunpack.c.h.bf16 %v697
        %v758 = vunpack.c.l.bf16 %v698
        %v759 = vunpack.c.h.bf16 %v698
        %v760 = vunpack.c.l.bf16 %v699
        %v761 = vunpack.c.h.bf16 %v699
        %v762 = vunpack.c.l.bf16 %v700
        %v763 = vunpack.c.h.bf16 %v700
        %v764 = vunpack.c.l.bf16 %v701
        %v765 = vunpack.c.h.bf16 %v701
        %v766 = vmul.f32 %v702, %v462
        %v767 = vmul.f32 %v703, %v575
        %v768 = vmul.f32 %v704, %v465
        %v769 = vmul.f32 %v705, %v578
        %v770 = vmul.f32 %v706, %v468
        %v771 = vmul.f32 %v707, %v581
        %v772 = vmul.f32 %v708, %v471
        %v773 = vmul.f32 %v709, %v584
        %v774 = vmul.f32 %v710, %v474
        %v775 = vmul.f32 %v711, %v587
        %v776 = vmul.f32 %v712, %v477
        %v777 = vmul.f32 %v713, %v590
        %v778 = vmul.f32 %v714, %v480
        %v779 = vmul.f32 %v715, %v593
        %v780 = vmul.f32 %v716, %v483
        %v781 = vmul.f32 %v717, %v596
        %v782 = vmul.f32 %v718, %v486
        %v783 = vmul.f32 %v719, %v599
        %v784 = vmul.f32 %v720, %v489
        %v785 = vmul.f32 %v721, %v602
        %v786 = vmul.f32 %v722, %v492
        %v787 = vmul.f32 %v723, %v605
        %v788 = vmul.f32 %v724, %v495
        %v789 = vmul.f32 %v725, %v608
        %v790 = vmul.f32 %v726, %v498
        %v791 = vmul.f32 %v727, %v611
        %v792 = vmul.f32 %v728, %v501
        %v793 = vmul.f32 %v729, %v614
        %v794 = vmul.f32 %v730, %v504
        %v795 = vmul.f32 %v731, %v617
        %v796 = vmul.f32 %v732, %v507
        %v797 = vmul.f32 %v733, %v620
        %v798 = vmul.f32 %v734, %v510
        %v799 = vmul.f32 %v735, %v623
        %v800 = vmul.f32 %v736, %v513
        %v801 = vmul.f32 %v737, %v626
        %v802 = vmul.f32 %v738, %v516
        %v803 = vmul.f32 %v739, %v629
        %v804 = vmul.f32 %v740, %v519
        %v805 = vmul.f32 %v741, %v632
        %v806 = vmul.f32 %v742, %v522
        %v807 = vmul.f32 %v743, %v635
        %v808 = vmul.f32 %v744, %v525
        %v809 = vmul.f32 %v745, %v638
        %v810 = vmul.f32 %v746, %v528
        %v811 = vmul.f32 %v747, %v641
        %v812 = vmul.f32 %v748, %v531
        %v813 = vmul.f32 %v749, %v644
        %v814 = vmul.f32 %v750, %v534
        %v815 = vmul.f32 %v751, %v647
        %v816 = vmul.f32 %v752, %v537
        %v817 = vmul.f32 %v753, %v650
        %v818 = vmul.f32 %v754, %v540
        %v819 = vmul.f32 %v755, %v653
        %v820 = vmul.f32 %v756, %v543
        %v821 = vmul.f32 %v757, %v656
        %v822 = vmul.f32 %v758, %v546
        %v823 = vmul.f32 %v759, %v659
        %v824 = vmul.f32 %v760, %v549
        %v825 = vmul.f32 %v761, %v662
        %v826 = vmul.f32 %v762, %v552
        %v827 = vmul.f32 %v763, %v665
        %v828 = vmul.f32 %v764, %v555
        %v829 = vmul.f32 %v765, %v668
        %v830 = vadd.f32 %v766, %v767
        %v831 = vadd.f32 %v830, %v768
        %v832 = vadd.f32 %v831, %v769
        %v833 = vadd.f32 %v832, %v770
        %v834 = vadd.f32 %v833, %v771
        %v835 = vadd.f32 %v834, %v772
        %v836 = vadd.f32 %v835, %v773
        %v837 = vadd.f32 %v836, %v774
        %v838 = vadd.f32 %v837, %v775
        %v839 = vadd.f32 %v838, %v776
        %v840 = vadd.f32 %v839, %v777
        %v841 = vadd.f32 %v840, %v778
        %v842 = vadd.f32 %v841, %v779
        %v843 = vadd.f32 %v842, %v780
        %v844 = vadd.f32 %v843, %v781
        %v845 = vadd.f32 %v844, %v782
        %v846 = vadd.f32 %v845, %v783
        %v847 = vadd.f32 %v846, %v784
        %v848 = vadd.f32 %v847, %v785
        %v849 = vadd.f32 %v848, %v786
        %v850 = vadd.f32 %v849, %v787
        %v851 = vadd.f32 %v850, %v788
        %v852 = vadd.f32 %v851, %v789
        %v853 = vadd.f32 %v852, %v790
        %v854 = vadd.f32 %v853, %v791
        %v855 = vadd.f32 %v854, %v792
        %v856 = vadd.f32 %v855, %v793
        %v857 = vadd.f32 %v856, %v794
        %v858 = vadd.f32 %v857, %v795
        %v859 = vadd.f32 %v858, %v796
        %v860 = vadd.f32 %v859, %v797
        %v861 = vadd.f32 %v860, %v798
        %v862 = vadd.f32 %v861, %v799
        %v863 = vadd.f32 %v862, %v800
        %v864 = vadd.f32 %v863, %v801
        %v865 = vadd.f32 %v864, %v802
        %v866 = vadd.f32 %v865, %v803
        %v867 = vadd.f32 %v866, %v804
        %v868 = vadd.f32 %v867, %v805
        %v869 = vadd.f32 %v868, %v806
        %v870 = vadd.f32 %v869, %v807
        %v871 = vadd.f32 %v870, %v808
        %v872 = vadd.f32 %v871, %v809
        %v873 = vadd.f32 %v872, %v810
        %v874 = vadd.f32 %v873, %v811
        %v875 = vadd.f32 %v874, %v812
        %v876 = vadd.f32 %v875, %v813
        %v877 = vadd.f32 %v876, %v814
        %v878 = vadd.f32 %v877, %v815
        %v879 = vadd.f32 %v878, %v816
        %v880 = vadd.f32 %v879, %v817
        %v881 = vadd.f32 %v880, %v818
        %v882 = vadd.f32 %v881, %v819
        %v883 = vadd.f32 %v882, %v820
        %v884 = vadd.f32 %v883, %v821
        %v885 = vadd.f32 %v884, %v822
        %v886 = vadd.f32 %v885, %v823
        %v887 = vadd.f32 %v886, %v824
        %v888 = vadd.f32 %v887, %v825
        %v889 = vadd.f32 %v888, %v826
        %v890 = vadd.f32 %v889, %v827
        %v891 = vadd.f32 %v890, %v828
        %v892 = vadd.f32 %v891, %v829
        %893 = vadd.xlane.f32.xlu0 %v892
        %v894 = vpop.xlane.xlu0 %893
        %v895 = vrot.slane %v894, 4
        %v896 = vadd.f32 %v894, %v895
        %v897 = vrot.slane %v896, 2
        %v898 = vadd.f32 %v896, %v897
        %v899 = vrot.slane %v898, 1
        %v900 = vadd.f32 %v898, %v899
        %s901 = vtos %v900
        %p902 = scmp.eq.s32.totalorder %s24, 0
        // Predicated region
        $region33: #{tpu_custom_call.1} parent=27 // pred_check
          %p903 = pneg %p902
        $region34: #{tpu_custom_call.1} parent=27 // pred_check_branch
          %905 = sbr.rel (%p903) target = $region36
        $region35: #{tpu_custom_call.1} parent=27 // pred_region
          %v906 = vstv %s901
          %907 = vst [vmem:[%s180] sm:$0xff] %v906
        $region36: #{tpu_custom_call.1} parent=27 // pred_fallthru
          _
        %p908 = scmp.gt.s32.totalorder %s24, 0
        // Predicated region
        $region37: #{tpu_custom_call.1} parent=27 // pred_check
          %p909 = pneg %p908
        $region38: #{tpu_custom_call.1} parent=27 // pred_check_branch
          %911 = sbr.rel (%p909) target = $region40
        $region39: #{tpu_custom_call.1} parent=27 // pred_region
          %v912 = vld [vmem:[%s180] sm:$0xff]
          %v913 = vstv %s901
          %v914 = vadd.f32 %v912, %v913
          %915 = vst [vmem:[%s180] sm:$0xff] %v914
        $region40: #{tpu_custom_call.1} parent=27 // pred_fallthru
          _
        %s916 = sand.u32 %s88, 1
        %s917 = scalar_lea.sflag [#allocation4], %s916
        %s918 = sand.u32 %s88, 1
        %s919 = smul.addr %s918, 8
        %s920 = scalar_lea.vmem [#allocation5], %s919
        // Predicated region
        $region41: #{tpu_custom_call.1} parent=27 // pred_check
          %p921 = pneg %p98
        $region42: #{tpu_custom_call.1} parent=27 // pred_check_branch
          %923 = sbr.rel (%p921) target = $region44
        $region43: #{tpu_custom_call.1} parent=27 // pred_region
          %925 = vsyncadd %s917, 0
          %s926 = smul.addr %s23, 8
          %s927 = scalar_lea.hbm %s2, %s926
          %s929 = sshll.u32 %s920, 4
          %s930 = int_to_ptr.vmem [resolvable:$true] %s929
          %s931 = sshll.u32 %s927, 4
          %s932 = int_to_ptr.hbm [resolvable:$true] %s931
          %934 = dma.vmem_to_hbm [thread:$0]  %s930, 128, %s932, %s917
        $region44: #{tpu_custom_call.1} parent=27 // pred_fallthru
          _
      $region28: #{tpu_custom_call.1} parent=5 // pred_fallthru
        _
      %p935 = scmp.le.s32.totalorder 2, %s14
      // Predicated region
      $region45: #{tpu_custom_call.1} parent=5 // pred_check
        %p936 = pneg %p935
      $region46: #{tpu_custom_call.1} parent=5 // pred_check_branch
        %938 = sbr.rel (%p936) target = $region48
      $region47: #{tpu_custom_call.1} parent=5 // pred_region
        %s939 = ssub.s32 %s14, 2
        // Predicated region
        $region49: #{tpu_custom_call.1} parent=47 // pred_check
          %p940 = pneg %p104
        $region50: #{tpu_custom_call.1} parent=47 // pred_check_branch
          %942 = sbr.rel (%p940) target = $region52
        $region51: #{tpu_custom_call.1} parent=47 // pred_region
          %s943 = sand.u32 %s89, 1
          %s944 = scalar_lea.sflag [#allocation4], %s943
          %s945 = sand.u32 %s89, 1
          %s946 = smul.addr %s945, 8
          %s947 = scalar_lea.vmem [#allocation5], %s946
          %949 = dma.done %s944, 128
        $region52: #{tpu_custom_call.1} parent=47 // pred_fallthru
          _
      $region48: #{tpu_custom_call.1} parent=5 // pred_fallthru
        _
    $region6: #{tpu_custom_call.1} parent=1 // loop_footer
      %s18 = sadd.s32 1, %s14
    $region7: #{tpu_custom_call.1} parent=1 // loop_footer_branch
      %13 = sbr.rel target = $region3
    $region8: #{tpu_custom_call.1} parent=1 // loop_exit
      _
    %950 = vsyncpa [#allocation3], 1
    %s951 = scalar_lea.sflag [#allocation3], 1
    %952 = vsyncpa %s951, 1
    %953 = vsyncpa [#allocation4], 1
    %s954 = scalar_lea.sflag [#allocation4], 1
    %955 = vsyncpa %s954, 1

</llo_original>
